<compile_context>
chip_gen: v7x
topology: tpu7x:2x2x1
jax: 0.10.0
libtpu: 0.0.40
codegen_flags: <defaults>
</compile_context>

<pallas_src>
import functools

import jax
import jax.numpy as jnp
from jax.experimental import pallas as pl
from jax.experimental.pallas import tpu as pltpu


# --------------------------- fused STGCN block kernel ------------------------
def _stgcn_block_kernel(xim_ref, w1_ref, b1_ref, sclm_ref, bs_ref,
                        w2_ref, b2_ref, gamma_ref, beta_ref, out_ref,
                        *, Kt, nc_t, eps):
    f32 = jnp.float32
    cdt = w1_ref.dtype                       # MXU input dtype (f32 or bf16)

    # ---- TCL-1 (GLU): one fused im2col matmul, P|Q halves concatenated. ----
    # xim: (M, Kt*nc_si) host-built im2col, M = B_blk * T1p rows.
    pq = jnp.dot(xim_ref[...], w1_ref[...], preferred_element_type=f32)
    pq = pq + b1_ref[...]
    y1 = pq[:, :nc_t] * jax.nn.sigmoid(pq[:, nc_t:])          # (M, nc_t) f32

    # ---- SCL Chebyshev graph conv folded to ONE matmul; identity residual. -
    g = jnp.dot(y1.astype(cdt), sclm_ref[...], preferred_element_type=f32)
    y2 = jnp.maximum(g + bs_ref[...] + y1, 0.0)                # (M, nc_t)

    # ---- TCL-2 (ReLU): in-kernel im2col over per-batch time rows. ----------
    # Row i of shift-k is y2 row i+k; shifts that cross a batch's 8-row block
    # only land on padded (discarded) output rows, so an 8-sublane-aligned
    # zero-pad + static slices is enough (pltpu.roll is the XLU alternative).
    rows = y2.shape[0]
    if Kt > 1:
        pad_rows = ((Kt - 1 + 7) // 8) * 8            # keep concat tile-aligned
        zpad = jnp.zeros((pad_rows, y2.shape[1]), f32)
        y2p = jnp.concatenate([y2, zpad], axis=0)
        y2im = jnp.concatenate([y2p[k:k + rows] for k in range(Kt)], axis=1)
    else:
        y2im = y2                                              # (M, Kt*nc_t)
    r = jnp.dot(y2im.astype(cdt), w2_ref[...], preferred_element_type=f32)
    y3 = jnp.maximum(r + b2_ref[...], 0.0)                     # (M, nc_oo)

    # ---- LayerNorm over (n, c_oo) = the 128-wide lane axis, + affine. ------
    mean = jnp.mean(y3, axis=1, keepdims=True)
    msq = jnp.mean(y3 * y3, axis=1, keepdims=True)
    xn = (y3 - mean) * jax.lax.rsqrt(msq - mean * mean + eps)
    # TODO(synk): nn.Dropout implemented with eval() semantics (identity);
    #             train-mode parity would need pltpu.prng_seed/prng_random_bits.
    out_ref[...] = xn * gamma_ref[...] + beta_ref[...]


# ------------------------------- forward wrapper -----------------------------
@functools.partial(jax.jit, static_argnames=("Ks", "Kt", "use_bf16"))
def stgcn_block_forward(x_nchw, adj, params, *, Ks, Kt, use_bf16=False):
    """x_nchw: (B, c_si, T, n) as in PyTorch; returns (B, c_oo, T-2*(Kt-1), n)."""
    B, c_si, T, n = x_nchw.shape
    c_t = params["wp1"].shape[2]
    c_oo = params["wt2"].shape[2]
    T1 = T - Kt + 1
    T2 = T1 - Kt + 1
    assert T2 >= 1, "sequence too short for two Kt-tap temporal convs"
    nc_si, nc_t, nc_oo = n * c_si, n * c_t, n * c_oo

    # Pad T1 up to 8 sublanes; fold B_blk batches into the matmul M dimension.
    T1p = ((T1 + 7) // 8) * 8
    B_blk = max(d for d in range(1, min(B, 16) + 1) if B % d == 0)
    num_blocks = B // B_blk
    M = B_blk * T1p                                   # rows per grid step

    eye_n = jnp.eye(n, dtype=jnp.float32)
    mm_dt = jnp.bfloat16 if use_bf16 else jnp.float32

    # ---- host-side im2col of the input (lane-dense, tap-major columns) -----
    xf = jnp.transpose(x_nchw, (0, 2, 3, 1)).astype(jnp.float32).reshape(B, T, nc_si)
    xim = jnp.concatenate([xf[:, k:k + T1, :] for k in range(Kt)], axis=-1)
    if T1p > T1:
        xim = jnp.concatenate(
            [xim, jnp.zeros((B, T1p - T1, Kt * nc_si), jnp.float32)], axis=1)
    xim = xim.reshape(num_blocks * M, Kt * nc_si).astype(mm_dt)

    # ---------------- host-side weight folding (tiny matrices) --------------
    # TCL-1: residual projection folded into tap Kt-1 of the "P" half; each
    # tap lifted to block-diag kron(I_n, W); P and Q concatenated -> 256 lanes.
    wp1 = params["wp1"].at[Kt - 1].add(params["wres1"])
    wp = jnp.concatenate([jnp.kron(eye_n, wp1[k]) for k in range(Kt)], axis=0)
    wq = jnp.concatenate([jnp.kron(eye_n, params["wq1"][k]) for k in range(Kt)],
                         axis=0)
    w1 = jnp.concatenate([wp, wq], axis=1).astype(mm_dt)      # (Kt*nc_si, 2*nc_t)
    b1 = jnp.concatenate([jnp.tile(params["bp1"] + params["bres1"], n),
                          jnp.tile(params["bq1"], n)])[None, :]

    # SCL: whole Ks-term Chebyshev graph conv == one (nc_t, nc_t) matrix.
    sclm = sum(jnp.kron(adj[:, k * n:(k + 1) * n], params["w3"][k])
               for k in range(Ks)).astype(mm_dt)
    bsf = jnp.tile(params["bs"], n)[None, :]

    # TCL-2: residual folded into tap Kt-1; taps stacked along the K axis so
    # the in-kernel im2col feeds one (M, Kt*nc_t) x (Kt*nc_t, nc_oo) matmul.
    wt2 = params["wt2"].at[Kt - 1].add(params["wres2"])
    w2 = jnp.concatenate([jnp.kron(eye_n, wt2[k]) for k in range(Kt)],
                         axis=0).astype(mm_dt)                # (Kt*nc_t, nc_oo)
    b2 = jnp.tile(params["bt2"] + params["bres2"], n)[None, :]

    gammaf = params["gamma"].reshape(1, nc_oo)
    betaf = params["beta"].reshape(1, nc_oo)

    # ---- cost estimate + tight VMEM budget ----------------------------------
    itemsize = 2 if use_bf16 else 4
    flops = 2 * B * T1p * (Kt * nc_si * 2 * nc_t + nc_t * nc_t + Kt * nc_t * nc_oo)
    transc = B * T1p * (nc_t + 1)                    # sigmoid lanes + rsqrt/row
    small_bytes = 4 * (b1.size + bsf.size + b2.size + gammaf.size + betaf.size)
    bytes_accessed = (itemsize * (B * T1p * Kt * nc_si + w1.size + sclm.size + w2.size)
                      + 4 * B * T1p * nc_oo + small_bytes)
    cost = pl.CostEstimate(flops=flops, transcendentals=transc,
                           bytes_accessed=bytes_accessed)
    weight_bytes = itemsize * (w1.size + sclm.size + w2.size)
    io_block_bytes = itemsize * M * Kt * nc_si + 4 * M * nc_oo
    vmem_limit = int(max(4 << 20, 4 * (weight_bytes + small_bytes + io_block_bytes)))

    const2 = lambda g: (0, 0)
    out = pl.pallas_call(
        functools.partial(_stgcn_block_kernel, Kt=Kt, nc_t=nc_t, eps=1e-5),
        out_shape=jax.ShapeDtypeStruct((num_blocks * M, nc_oo), jnp.float32),
        grid=(num_blocks,),
        in_specs=[
            pl.BlockSpec((M, Kt * nc_si), lambda g: (g, 0)),       # im2col slab
            pl.BlockSpec((Kt * nc_si, 2 * nc_t), const2),          # fused P|Q wt
            pl.BlockSpec((1, 2 * nc_t), const2),                   # fused P|Q bias
            pl.BlockSpec((nc_t, nc_t), const2),                    # folded SCL
            pl.BlockSpec((1, nc_t), const2),                       # SCL bias
            pl.BlockSpec((Kt * nc_t, nc_oo), const2),              # TCL-2 weight
            pl.BlockSpec((1, nc_oo), const2),                      # TCL-2 bias
            pl.BlockSpec((1, nc_oo), const2),                      # LN gamma
            pl.BlockSpec((1, nc_oo), const2),                      # LN beta
        ],
        out_specs=pl.BlockSpec((M, nc_oo), lambda g: (g, 0)),
        # Weight/bias specs are grid-invariant; once n scales, single-buffer
        # them (pl.Buffered(1)) and/or shard num_blocks with CORE_PARALLEL on
        # v7x.  At these sizes they are <0.5 MiB so the default is fine.
        compiler_params=pltpu.CompilerParams(
            dimension_semantics=("parallel",),
            vmem_limit_bytes=vmem_limit,
        ),
        cost_estimate=cost,
    )(xim, w1, b1, sclm, bsf, w2, b2, gammaf, betaf)

    # (B*T1p, n*c_oo) -> drop time padding -> NCHW (B, c_oo, T2, n).
    out = out.reshape(B, T1p, n, c_oo)[:, :T2]
    return jnp.transpose(out, (0, 3, 1, 2))


# ------------------------------- parameters ----------------------------------
def init_params(key, Ks, Kt, channels, n):
    c_si, c_t, c_oo = channels
    ks = jax.random.split(key, 6)

    def randn(k, shape, scale=0.1):
        return scale * jax.random.normal(k, shape, dtype=jnp.float32)

    def res_proj(k, c_in, c_out):
        if c_in > c_out:                                   # learned 1x1 conv
            return randn(k, (c_in, c_out)), jnp.zeros((c_out,), jnp.float32)
        if c_in < c_out:                                   # zero channel pad
            w = jnp.concatenate([jnp.eye(c_in, dtype=jnp.float32),
                                 jnp.zeros((c_in, c_out - c_in), jnp.float32)],
                                axis=1)
            return w, jnp.zeros((c_out,), jnp.float32)
        return jnp.eye(c_in, dtype=jnp.float32), jnp.zeros((c_out,), jnp.float32)

    wres1, bres1 = res_proj(ks[0], c_si, c_t)
    wres2, bres2 = res_proj(ks[1], c_t, c_oo)
    return dict(
        wp1=randn(ks[2], (Kt, c_si, c_t)),                 # GLU value half
        wq1=randn(ks[3], (Kt, c_si, c_t)),                 # GLU gate half
        bp1=jnp.zeros((c_t,), jnp.float32),
        bq1=jnp.zeros((c_t,), jnp.float32),
        wres1=wres1, bres1=bres1,
        w3=jax.random.normal(ks[4], (Ks, c_t, c_t), dtype=jnp.float32),  # SCL ws
        bs=jnp.zeros((c_t,), jnp.float32),
        wt2=randn(ks[5], (Kt, c_t, c_oo)),                 # ReLU temporal conv
        bt2=jnp.zeros((c_oo,), jnp.float32),
        wres2=wres2, bres2=bres2,
        gamma=jnp.ones((n, c_oo), jnp.float32),            # LayerNorm((n, c_oo))
        beta=jnp.zeros((n, c_oo), jnp.float32),
    )


# --------------------------- pure-jnp reference -------------------------------
def reference_forward(x_nchw, adj, params, *, Ks, Kt, eps=1e-5):
    """Unfolded per-channel math mirroring the PyTorch module (eval mode)."""
    x = jnp.transpose(x_nchw, (0, 2, 3, 1)).astype(jnp.float32)   # (B, T, n, c)
    B, T, n, _ = x.shape

    def tconv(z, w, b):                                   # w: (Kt, c_in, c_out)
        To = z.shape[1] - Kt + 1
        acc = jnp.zeros((B, To, n, w.shape[2]), jnp.float32) + b
        for k in range(Kt):
            acc = acc + jnp.einsum("btnc,cd->btnd", z[:, k:k + To], w[k])
        return acc

    # TCL-1 (GLU)
    res1 = jnp.einsum("btnc,cd->btnd", x[:, Kt - 1:], params["wres1"]) + params["bres1"]
    y1 = ((tconv(x, params["wp1"], params["bp1"]) + res1)
          * jax.nn.sigmoid(tconv(x, params["wq1"], params["bq1"])))

    # SCL
    g = jnp.zeros_like(y1)
    for k in range(Ks):
        a_k = adj[:, k * n:(k + 1) * n]
        z = jnp.einsum("btic,ij->btjc", y1, a_k)
        g = g + jnp.einsum("btjc,cd->btjd", z, params["w3"][k])
    y2 = jnp.maximum(g + params["bs"] + y1, 0.0)

    # TCL-2 (ReLU)
    res2 = jnp.einsum("btnc,cd->btnd", y2[:, Kt - 1:], params["wres2"]) + params["bres2"]
    y3 = jnp.maximum(tconv(y2, params["wt2"], params["bt2"]) + res2, 0.0)

    # LayerNorm over (n, c_oo); dropout is identity in eval mode.
    mean = jnp.mean(y3, axis=(2, 3), keepdims=True)
    var = jnp.mean(y3 * y3, axis=(2, 3), keepdims=True) - mean * mean
    y4 = (y3 - mean) * jax.lax.rsqrt(var + eps) * params["gamma"] + params["beta"]
    return jnp.transpose(y4, (0, 3, 1, 2))


if __name__ == "__main__":
    B, T, n = 2, 8, 16
    Ks, Kt = 3, 3
    channels = (4, 8, 8)                                  # (c_si, c_t, c_oo)

    key = jax.random.PRNGKey(0)
    kx, kadj, kp = jax.random.split(key, 3)
    x = jax.random.normal(kx, (B, channels[0], T, n), dtype=jnp.float32)   # NCHW
    adj = 0.1 * jax.random.normal(kadj, (n, Ks * n), dtype=jnp.float32)    # Chebyshev kernel
    params = init_params(kp, Ks, Kt, channels, n)

    ref = jax.block_until_ready(reference_forward(x, adj, params, Ks=Ks, Kt=Kt))

    # f32 MXU inputs (default): must match the reference tightly.
    out = jax.block_until_ready(stgcn_block_forward(x, adj, params, Ks=Ks, Kt=Kt))
    assert out.shape == (B, channels[2], T - 2 * (Kt - 1), n), out.shape
    err = float(jnp.max(jnp.abs(out - ref)))
    assert err < 2e-3, f"f32 max |pallas - reference| = {err}"

    # bf16 MXU inputs (v6e/v7x fast path): small, bounded numeric drift.
    out_bf16 = jax.block_until_ready(
        stgcn_block_forward(x, adj, params, Ks=Ks, Kt=Kt, use_bf16=True))
    err_bf16 = float(jnp.max(jnp.abs(out_bf16 - ref)))
    assert err_bf16 < 2e-1, f"bf16 max |pallas - reference| = {err_bf16}"

    print("KERNEL_OK")
</pallas_src>

<mosaic_0001>
module attributes {stable_mosaic.version = 11 : i64} {
  func.func @_stgcn_block_kernel(%arg0: i32, %arg1: memref<16x192xf32, #tpu.memory_space<vmem>>, %arg2: memref<192x256xf32, #tpu.memory_space<vmem>>, %arg3: memref<1x256xf32, #tpu.memory_space<vmem>>, %arg4: memref<128x128xf32, #tpu.memory_space<vmem>>, %arg5: memref<1x128xf32, #tpu.memory_space<vmem>>, %arg6: memref<384x128xf32, #tpu.memory_space<vmem>>, %arg7: memref<1x128xf32, #tpu.memory_space<vmem>>, %arg8: memref<1x128xf32, #tpu.memory_space<vmem>>, %arg9: memref<1x128xf32, #tpu.memory_space<vmem>>, %arg10: memref<16x128xf32, #tpu.memory_space<vmem>>) attributes {dimension_semantics = [#tpu.dimension_semantics<parallel>], iteration_bounds = array<i64: 1>, scalar_prefetch = 0 : i64, scratch_operands = 0 : i64, tpu.core_type = #tpu.core_type<tc>, window_params = [{transform_indices = @transform_0, window_bounds = array<i64: 16, 192>}, {pipeline_mode = #tpu.pipeline_mode<synchronous>, transform_indices = @transform_1, window_bounds = array<i64: 192, 256>}, {pipeline_mode = #tpu.pipeline_mode<synchronous>, transform_indices = @transform_2, window_bounds = array<i64: 1, 256>}, {pipeline_mode = #tpu.pipeline_mode<synchronous>, transform_indices = @transform_3, window_bounds = array<i64: 128, 128>}, {pipeline_mode = #tpu.pipeline_mode<synchronous>, transform_indices = @transform_4, window_bounds = array<i64: 1, 128>}, {pipeline_mode = #tpu.pipeline_mode<synchronous>, transform_indices = @transform_5, window_bounds = array<i64: 384, 128>}, {pipeline_mode = #tpu.pipeline_mode<synchronous>, transform_indices = @transform_6, window_bounds = array<i64: 1, 128>}, {pipeline_mode = #tpu.pipeline_mode<synchronous>, transform_indices = @transform_7, window_bounds = array<i64: 1, 128>}, {pipeline_mode = #tpu.pipeline_mode<synchronous>, transform_indices = @transform_8, window_bounds = array<i64: 1, 128>}, {transform_indices = @transform_9, window_bounds = array<i64: 16, 128>}]} {
    %c0 = arith.constant 0 : index
    %c0_0 = arith.constant 0 : index
    %0 = vector.load %arg1[%c0, %c0_0] : memref<16x192xf32, #tpu.memory_space<vmem>>, vector<16x192xf32>
    %c0_1 = arith.constant 0 : index
    %c0_2 = arith.constant 0 : index
    %1 = vector.load %arg2[%c0_1, %c0_2] : memref<192x256xf32, #tpu.memory_space<vmem>>, vector<192x256xf32>
    %cst = arith.constant dense<0.000000e+00> : vector<16x256xf32>
    %2 = tpu.matmul %0, %1, %cst {dimension_numbers = #tpu.dot_dimension_numbers<[1], [0], [0], [1], [0, 0, 1, 1], [], []>} : vector<16x192xf32>, vector<192x256xf32>, vector<16x256xf32> -> vector<16x256xf32>
    %c0_3 = arith.constant 0 : index
    %c0_4 = arith.constant 0 : index
    %3 = vector.load %arg3[%c0_3, %c0_4] : memref<1x256xf32, #tpu.memory_space<vmem>>, vector<1x256xf32>
    %4 = vector.broadcast %3 : vector<1x256xf32> to vector<16x256xf32>
    %5 = arith.addf %2, %4 : vector<16x256xf32>
    %6 = vector.extract_strided_slice %5 {offsets = [0, 0], sizes = [16, 128], strides = [1, 1]} : vector<16x256xf32> to vector<16x128xf32>
    %7 = vector.extract_strided_slice %5 {offsets = [0, 128], sizes = [16, 128], strides = [1, 1]} : vector<16x256xf32> to vector<16x128xf32>
    %8 = arith.negf %7 : vector<16x128xf32>
    %9 = math.exp %8 : vector<16x128xf32>
    %cst_5 = arith.constant 1.000000e+00 : f32
    %10 = vector.broadcast %cst_5 : f32 to vector<16x128xf32>
    %11 = arith.addf %10, %9 : vector<16x128xf32>
    %12 = arith.divf %10, %11 : vector<16x128xf32>
    %13 = arith.mulf %6, %12 : vector<16x128xf32>
    %c0_6 = arith.constant 0 : index
    %c0_7 = arith.constant 0 : index
    %14 = vector.load %arg4[%c0_6, %c0_7] : memref<128x128xf32, #tpu.memory_space<vmem>>, vector<128x128xf32>
    %cst_8 = arith.constant dense<0.000000e+00> : vector<16x128xf32>
    %15 = tpu.matmul %13, %14, %cst_8 {dimension_numbers = #tpu.dot_dimension_numbers<[1], [0], [0], [1], [0, 0, 1, 1], [], []>} : vector<16x128xf32>, vector<128x128xf32>, vector<16x128xf32> -> vector<16x128xf32>
    %c0_9 = arith.constant 0 : index
    %c0_10 = arith.constant 0 : index
    %16 = vector.load %arg5[%c0_9, %c0_10] : memref<1x128xf32, #tpu.memory_space<vmem>>, vector<1x128xf32>
    %17 = vector.broadcast %16 : vector<1x128xf32> to vector<16x128xf32>
    %18 = arith.addf %15, %17 : vector<16x128xf32>
    %19 = arith.addf %18, %13 : vector<16x128xf32>
    %cst_11 = arith.constant 0.000000e+00 : f32
    %20 = vector.broadcast %cst_11 : f32 to vector<16x128xf32>
    %21 = arith.maximumf %19, %20 : vector<16x128xf32>
    %cst_12 = arith.constant 0.000000e+00 : f32
    %22 = vector.broadcast %cst_12 : f32 to vector<8x128xf32>
    %23 = tpu.concatenate %21, %22 in 0 : vector<16x128xf32>, vector<8x128xf32> -> vector<24x128xf32>
    %24 = vector.extract_strided_slice %23 {offsets = [0, 0], sizes = [16, 128], strides = [1, 1]} : vector<24x128xf32> to vector<16x128xf32>
    %25 = vector.extract_strided_slice %23 {offsets = [1, 0], sizes = [16, 128], strides = [1, 1]} : vector<24x128xf32> to vector<16x128xf32>
    %26 = vector.extract_strided_slice %23 {offsets = [2, 0], sizes = [16, 128], strides = [1, 1]} : vector<24x128xf32> to vector<16x128xf32>
    %27 = tpu.concatenate %24, %25, %26 in 1 : vector<16x128xf32>, vector<16x128xf32>, vector<16x128xf32> -> vector<16x384xf32>
    %c0_13 = arith.constant 0 : index
    %c0_14 = arith.constant 0 : index
    %28 = vector.load %arg6[%c0_13, %c0_14] : memref<384x128xf32, #tpu.memory_space<vmem>>, vector<384x128xf32>
    %cst_15 = arith.constant dense<0.000000e+00> : vector<16x128xf32>
    %29 = tpu.matmul %27, %28, %cst_15 {dimension_numbers = #tpu.dot_dimension_numbers<[1], [0], [0], [1], [0, 0, 1, 1], [], []>} : vector<16x384xf32>, vector<384x128xf32>, vector<16x128xf32> -> vector<16x128xf32>
    %c0_16 = arith.constant 0 : index
    %c0_17 = arith.constant 0 : index
    %30 = vector.load %arg7[%c0_16, %c0_17] : memref<1x128xf32, #tpu.memory_space<vmem>>, vector<1x128xf32>
    %31 = vector.broadcast %30 : vector<1x128xf32> to vector<16x128xf32>
    %32 = arith.addf %29, %31 : vector<16x128xf32>
    %cst_18 = arith.constant 0.000000e+00 : f32
    %33 = vector.broadcast %cst_18 : f32 to vector<16x128xf32>
    %34 = arith.maximumf %32, %33 : vector<16x128xf32>
    %cst_19 = arith.constant dense<0.000000e+00> : vector<16xf32>
    %35 = vector.multi_reduction <add>, %34, %cst_19 [1] : vector<16x128xf32> to vector<16xf32>
    %36 = vector.shape_cast %35 : vector<16xf32> to vector<16x1xf32>
    %cst_20 = arith.constant 1.280000e+02 : f32
    %37 = vector.broadcast %cst_20 : f32 to vector<16x1xf32>
    %38 = arith.divf %36, %37 : vector<16x1xf32>
    %39 = arith.mulf %34, %34 : vector<16x128xf32>
    %cst_21 = arith.constant dense<0.000000e+00> : vector<16xf32>
    %40 = vector.multi_reduction <add>, %39, %cst_21 [1] : vector<16x128xf32> to vector<16xf32>
    %41 = vector.shape_cast %40 : vector<16xf32> to vector<16x1xf32>
    %cst_22 = arith.constant 1.280000e+02 : f32
    %42 = vector.broadcast %cst_22 : f32 to vector<16x1xf32>
    %43 = arith.divf %41, %42 : vector<16x1xf32>
    %44 = vector.broadcast %38 : vector<16x1xf32> to vector<16x128xf32>
    %45 = arith.subf %34, %44 : vector<16x128xf32>
    %46 = arith.mulf %38, %38 : vector<16x1xf32>
    %47 = arith.subf %43, %46 : vector<16x1xf32>
    %cst_23 = arith.constant 9.99999974E-6 : f32
    %48 = vector.broadcast %cst_23 : f32 to vector<16x1xf32>
    %49 = arith.addf %47, %48 : vector<16x1xf32>
    %50 = math.rsqrt %49 : vector<16x1xf32>
    %51 = vector.broadcast %50 : vector<16x1xf32> to vector<16x128xf32>
    %52 = arith.mulf %45, %51 : vector<16x128xf32>
    %c0_24 = arith.constant 0 : index
    %c0_25 = arith.constant 0 : index
    %53 = vector.load %arg8[%c0_24, %c0_25] : memref<1x128xf32, #tpu.memory_space<vmem>>, vector<1x128xf32>
    %54 = vector.broadcast %53 : vector<1x128xf32> to vector<16x128xf32>
    %55 = arith.mulf %52, %54 : vector<16x128xf32>
    %c0_26 = arith.constant 0 : index
    %c0_27 = arith.constant 0 : index
    %56 = vector.load %arg9[%c0_26, %c0_27] : memref<1x128xf32, #tpu.memory_space<vmem>>, vector<1x128xf32>
    %57 = vector.broadcast %56 : vector<1x128xf32> to vector<16x128xf32>
    %58 = arith.addf %55, %57 : vector<16x128xf32>
    %c0_28 = arith.constant 0 : index
    %c0_29 = arith.constant 0 : index
    %59 = vector.load %arg10[%c0_28, %c0_29] : memref<16x128xf32, #tpu.memory_space<vmem>>, vector<16x128xf32>
    tpu.vector_store %arg10[%c0_28, %c0_29], %58 {strides = array<i32>} : memref<16x128xf32, #tpu.memory_space<vmem>>, vector<16x128xf32>,
    return
  }
  func.func @transform_0(%arg0: i32) -> (i32, i32) {
    %c0_i32 = arith.constant 0 : i32
    %c0_i32_0 = arith.constant 0 : i32
    return %arg0, %c0_i32 : i32, i32
  }
  func.func @transform_1(%arg0: i32) -> (i32, i32) {
    %c0_i32 = arith.constant 0 : i32
    %c0_i32_0 = arith.constant 0 : i32
    %c0_i32_1 = arith.constant 0 : i32
    return %c0_i32, %c0_i32_0 : i32, i32
  }
  func.func @transform_2(%arg0: i32) -> (i32, i32) {
    %c0_i32 = arith.constant 0 : i32
    %c0_i32_0 = arith.constant 0 : i32
    %c0_i32_1 = arith.constant 0 : i32
    return %c0_i32, %c0_i32_0 : i32, i32
  }
  func.func @transform_3(%arg0: i32) -> (i32, i32) {
    %c0_i32 = arith.constant 0 : i32
    %c0_i32_0 = arith.constant 0 : i32
    %c0_i32_1 = arith.constant 0 : i32
    return %c0_i32, %c0_i32_0 : i32, i32
  }
  func.func @transform_4(%arg0: i32) -> (i32, i32) {
    %c0_i32 = arith.constant 0 : i32
    %c0_i32_0 = arith.constant 0 : i32
    %c0_i32_1 = arith.constant 0 : i32
    return %c0_i32, %c0_i32_0 : i32, i32
  }
  func.func @transform_5(%arg0: i32) -> (i32, i32) {
    %c0_i32 = arith.constant 0 : i32
    %c0_i32_0 = arith.constant 0 : i32
    %c0_i32_1 = arith.constant 0 : i32
    return %c0_i32, %c0_i32_0 : i32, i32
  }
  func.func @transform_6(%arg0: i32) -> (i32, i32) {
    %c0_i32 = arith.constant 0 : i32
    %c0_i32_0 = arith.constant 0 : i32
    %c0_i32_1 = arith.constant 0 : i32
    return %c0_i32, %c0_i32_0 : i32, i32
  }
  func.func @transform_7(%arg0: i32) -> (i32, i32) {
    %c0_i32 = arith.constant 0 : i32
    %c0_i32_0 = arith.constant 0 : i32
    %c0_i32_1 = arith.constant 0 : i32
    return %c0_i32, %c0_i32_0 : i32, i32
  }
  func.func @transform_8(%arg0: i32) -> (i32, i32) {
    %c0_i32 = arith.constant 0 : i32
    %c0_i32_0 = arith.constant 0 : i32
    %c0_i32_1 = arith.constant 0 : i32
    return %c0_i32, %c0_i32_0 : i32, i32
  }
  func.func @transform_9(%arg0: i32) -> (i32, i32) {
    %c0_i32 = arith.constant 0 : i32
    %c0_i32_0 = arith.constant 0 : i32
    return %arg0, %c0_i32 : i32, i32
  }
}

</mosaic_0001>

<llo_original>
// kernel: tile.23
$region0: #{tile.23}
  #allocation0 [shape = 's32[1]{0}', space=sflag, size = 0x4, scoped, tag = 'scoped memory for tile.23']
  %s0 = inlined_call_operand.vmem [shape: f32[8], index: 0, kind: input, shape index: {}]
  %s1 = inlined_call_operand.vmem [shape: f32[16,8], index: 1, kind: output, shape index: {}]
  // Predicated region
  $region2: #{tile.23} parent=0 // pred_check
    _
  $region3: #{tile.23} parent=0 // pred_check_branch
    %3 = sbr.rel (0) target = $region5
  $region4: #{tile.23} parent=0 // pred_region
    _
  $region5: #{tile.23} parent=0 // pred_fallthru
    _
  %v4 = vld [vmem:[%s0] ss:$0 sm:$0xff]
  %5 = vst [vmem:[%s1] sm:$0xff] %v4
  %s6 = scalar_lea.vmem %s1, 8
  %7 = vst [vmem:[%s6] sm:$0xff] %v4

// kernel: tile.24
$region0: #{tile.24}
  %s0 = inlined_call_operand.vmem [shape: f32[16,8], index: 0, kind: input, shape index: {}]
  %s1 = inlined_call_operand.vmem [shape: f32[128], index: 1, kind: output, shape index: {}]
  $region1: #{tile.24} parent=0
    #allocation0 [shape = 'u8[4096]{0}', space=vmem, size = 0x1000, scoped, tag = 'scoped mem for output reshape']
    %v2 = vld [vmem:[%s0] sm:$0x1]
    %vm3 = vcmask 64512
    %4 = vst.msk [vmem:[#allocation0] sm:$0x1] %vm3, %v2
    %s5 = scalar_lea.vmem %s0, 15
    %v6 = vld [vmem:[%s5] sm:$0x1]
    %7 = vrot.lane.b32.xlu0 %v6, 120
    %v8 = vpop.permute.xlu0 %7
    %vm9 = vcmask 1048512
    %10 = vst.msk [vmem:[#allocation0] sm:$0x1] %vm9, %v8
    %s11 = scalar_lea.vmem %s0, 14
    %v12 = vld [vmem:[%s11] sm:$0x1]
    %13 = vrot.lane.b32.xlu0 %v12, 112
    %v14 = vpop.permute.xlu0 %13
    %vm15 = vcmask 982912
    %16 = vst.msk [vmem:[#allocation0] sm:$0x1] %vm15, %v14
    %s17 = scalar_lea.vmem %s0, 13
    %v18 = vld [vmem:[%s17] sm:$0x1]
    %19 = vrot.lane.b32.xlu0 %v18, 104
    %v20 = vpop.permute.xlu0 %19
    %vm21 = vcmask 917312
    %22 = vst.msk [vmem:[#allocation0] sm:$0x1] %vm21, %v20
    %s23 = scalar_lea.vmem %s0, 12
    %v24 = vld [vmem:[%s23] sm:$0x1]
    %25 = vrot.lane.b32.xlu0 %v24, 96
    %v26 = vpop.permute.xlu0 %25
    %vm27 = vcmask 851712
    %28 = vst.msk [vmem:[#allocation0] sm:$0x1] %vm27, %v26
    %s29 = scalar_lea.vmem %s0, 11
    %v30 = vld [vmem:[%s29] sm:$0x1]
    %31 = vrot.lane.b32.xlu0 %v30, 88
    %v32 = vpop.permute.xlu0 %31
    %vm33 = vcmask 786112
    %34 = vst.msk [vmem:[#allocation0] sm:$0x1] %vm33, %v32
    %s35 = scalar_lea.vmem %s0, 10
    %v36 = vld [vmem:[%s35] sm:$0x1]
    %37 = vrot.lane.b32.xlu0 %v36, 80
    %v38 = vpop.permute.xlu0 %37
    %vm39 = vcmask 720512
    %40 = vst.msk [vmem:[#allocation0] sm:$0x1] %vm39, %v38
    %s41 = scalar_lea.vmem %s0, 9
    %v42 = vld [vmem:[%s41] sm:$0x1]
    %43 = vrot.lane.b32.xlu0 %v42, 72
    %v44 = vpop.permute.xlu0 %43
    %vm45 = vcmask 654912
    %46 = vst.msk [vmem:[#allocation0] sm:$0x1] %vm45, %v44
    %s47 = scalar_lea.vmem %s0, 8
    %v48 = vld [vmem:[%s47] sm:$0x1]
    %49 = vrot.lane.b32.xlu0 %v48, 64
    %v50 = vpop.permute.xlu0 %49
    %vm51 = vcmask 589312
    %52 = vst.msk [vmem:[#allocation0] sm:$0x1] %vm51, %v50
    %s53 = scalar_lea.vmem %s0, 7
    %v54 = vld [vmem:[%s53] sm:$0x1]
    %55 = vrot.lane.b32.xlu0 %v54, 56
    %v56 = vpop.permute.xlu0 %55
    %vm57 = vcmask 523712
    %58 = vst.msk [vmem:[#allocation0] sm:$0x1] %vm57, %v56
    %s59 = scalar_lea.vmem %s0, 6
    %v60 = vld [vmem:[%s59] sm:$0x1]
    %61 = vrot.lane.b32.xlu0 %v60, 48
    %v62 = vpop.permute.xlu0 %61
    %vm63 = vcmask 458112
    %64 = vst.msk [vmem:[#allocation0] sm:$0x1] %vm63, %v62
    %s65 = scalar_lea.vmem %s0, 5
    %v66 = vld [vmem:[%s65] sm:$0x1]
    %67 = vrot.lane.b32.xlu0 %v66, 40
    %v68 = vpop.permute.xlu0 %67
    %vm69 = vcmask 392512
    %70 = vst.msk [vmem:[#allocation0] sm:$0x1] %vm69, %v68
    %s71 = scalar_lea.vmem %s0, 4
    %v72 = vld [vmem:[%s71] sm:$0x1]
    %73 = vrot.lane.b32.xlu0 %v72, 32
    %v74 = vpop.permute.xlu0 %73
    %vm75 = vcmask 326912
    %76 = vst.msk [vmem:[#allocation0] sm:$0x1] %vm75, %v74
    %s77 = scalar_lea.vmem %s0, 3
    %v78 = vld [vmem:[%s77] sm:$0x1]
    %79 = vrot.lane.b32.xlu0 %v78, 24
    %v80 = vpop.permute.xlu0 %79
    %vm81 = vcmask 261312
    %82 = vst.msk [vmem:[#allocation0] sm:$0x1] %vm81, %v80
    %s83 = scalar_lea.vmem %s0, 2
    %v84 = vld [vmem:[%s83] sm:$0x1]
    %85 = vrot.lane.b32.xlu0 %v84, 16
    %v86 = vpop.permute.xlu0 %85
    %vm87 = vcmask 195712
    %88 = vst.msk [vmem:[#allocation0] sm:$0x1] %vm87, %v86
    %s89 = scalar_lea.vmem %s0, 1
    %v90 = vld [vmem:[%s89] sm:$0x1]
    %91 = vrot.lane.b32.xlu0 %v90, 8
    %v92 = vpop.permute.xlu0 %91
    %vm93 = vcmask 130112
    %94 = vst.msk [vmem:[#allocation0] sm:$0x1] %vm93, %v92
    %s96 = sshllo.u32 0, 1
    %v98 = vld [vmem:[#allocation0] sm:%s96]
    %s99 = sshllo.u32 0, 1
    %100 = vst [vmem:[%s1] sm:%s99] %v98

// kernel: tile.39
$region0: #{tile.39}
  %s0 = inlined_call_operand.vmem [shape: f32[16,8], index: 0, kind: input, shape index: {}]
  %s1 = inlined_call_operand.vmem [shape: f32[1,128], index: 1, kind: output, shape index: {}]
  $region1: #{tile.39} parent=0
    #allocation0 [shape = 'u8[4096]{0}', space=vmem, size = 0x1000, scoped, tag = 'scoped mem for output reshape']
    %v2 = vld [vmem:[%s0] sm:$0x1]
    %vm3 = vcmask 64512
    %4 = vst.msk [vmem:[#allocation0] sm:$0x1] %vm3, %v2
    %s5 = scalar_lea.vmem %s0, 15
    %v6 = vld [vmem:[%s5] sm:$0x1]
    %7 = vrot.lane.b32.xlu0 %v6, 120
    %v8 = vpop.permute.xlu0 %7
    %vm9 = vcmask 1048512
    %10 = vst.msk [vmem:[#allocation0] sm:$0x1] %vm9, %v8
    %s11 = scalar_lea.vmem %s0, 14
    %v12 = vld [vmem:[%s11] sm:$0x1]
    %13 = vrot.lane.b32.xlu0 %v12, 112
    %v14 = vpop.permute.xlu0 %13
    %vm15 = vcmask 982912
    %16 = vst.msk [vmem:[#allocation0] sm:$0x1] %vm15, %v14
    %s17 = scalar_lea.vmem %s0, 13
    %v18 = vld [vmem:[%s17] sm:$0x1]
    %19 = vrot.lane.b32.xlu0 %v18, 104
    %v20 = vpop.permute.xlu0 %19
    %vm21 = vcmask 917312
    %22 = vst.msk [vmem:[#allocation0] sm:$0x1] %vm21, %v20
    %s23 = scalar_lea.vmem %s0, 12
    %v24 = vld [vmem:[%s23] sm:$0x1]
    %25 = vrot.lane.b32.xlu0 %v24, 96
    %v26 = vpop.permute.xlu0 %25
    %vm27 = vcmask 851712
    %28 = vst.msk [vmem:[#allocation0] sm:$0x1] %vm27, %v26
    %s29 = scalar_lea.vmem %s0, 11
    %v30 = vld [vmem:[%s29] sm:$0x1]
    %31 = vrot.lane.b32.xlu0 %v30, 88
    %v32 = vpop.permute.xlu0 %31
    %vm33 = vcmask 786112
    %34 = vst.msk [vmem:[#allocation0] sm:$0x1] %vm33, %v32
    %s35 = scalar_lea.vmem %s0, 10
    %v36 = vld [vmem:[%s35] sm:$0x1]
    %37 = vrot.lane.b32.xlu0 %v36, 80
    %v38 = vpop.permute.xlu0 %37
    %vm39 = vcmask 720512
    %40 = vst.msk [vmem:[#allocation0] sm:$0x1] %vm39, %v38
    %s41 = scalar_lea.vmem %s0, 9
    %v42 = vld [vmem:[%s41] sm:$0x1]
    %43 = vrot.lane.b32.xlu0 %v42, 72
    %v44 = vpop.permute.xlu0 %43
    %vm45 = vcmask 654912
    %46 = vst.msk [vmem:[#allocation0] sm:$0x1] %vm45, %v44
    %s47 = scalar_lea.vmem %s0, 8
    %v48 = vld [vmem:[%s47] sm:$0x1]
    %49 = vrot.lane.b32.xlu0 %v48, 64
    %v50 = vpop.permute.xlu0 %49
    %vm51 = vcmask 589312
    %52 = vst.msk [vmem:[#allocation0] sm:$0x1] %vm51, %v50
    %s53 = scalar_lea.vmem %s0, 7
    %v54 = vld [vmem:[%s53] sm:$0x1]
    %55 = vrot.lane.b32.xlu0 %v54, 56
    %v56 = vpop.permute.xlu0 %55
    %vm57 = vcmask 523712
    %58 = vst.msk [vmem:[#allocation0] sm:$0x1] %vm57, %v56
    %s59 = scalar_lea.vmem %s0, 6
    %v60 = vld [vmem:[%s59] sm:$0x1]
    %61 = vrot.lane.b32.xlu0 %v60, 48
    %v62 = vpop.permute.xlu0 %61
    %vm63 = vcmask 458112
    %64 = vst.msk [vmem:[#allocation0] sm:$0x1] %vm63, %v62
    %s65 = scalar_lea.vmem %s0, 5
    %v66 = vld [vmem:[%s65] sm:$0x1]
    %67 = vrot.lane.b32.xlu0 %v66, 40
    %v68 = vpop.permute.xlu0 %67
    %vm69 = vcmask 392512
    %70 = vst.msk [vmem:[#allocation0] sm:$0x1] %vm69, %v68
    %s71 = scalar_lea.vmem %s0, 4
    %v72 = vld [vmem:[%s71] sm:$0x1]
    %73 = vrot.lane.b32.xlu0 %v72, 32
    %v74 = vpop.permute.xlu0 %73
    %vm75 = vcmask 326912
    %76 = vst.msk [vmem:[#allocation0] sm:$0x1] %vm75, %v74
    %s77 = scalar_lea.vmem %s0, 3
    %v78 = vld [vmem:[%s77] sm:$0x1]
    %79 = vrot.lane.b32.xlu0 %v78, 24
    %v80 = vpop.permute.xlu0 %79
    %vm81 = vcmask 261312
    %82 = vst.msk [vmem:[#allocation0] sm:$0x1] %vm81, %v80
    %s83 = scalar_lea.vmem %s0, 2
    %v84 = vld [vmem:[%s83] sm:$0x1]
    %85 = vrot.lane.b32.xlu0 %v84, 16
    %v86 = vpop.permute.xlu0 %85
    %vm87 = vcmask 195712
    %88 = vst.msk [vmem:[#allocation0] sm:$0x1] %vm87, %v86
    %s89 = scalar_lea.vmem %s0, 1
    %v90 = vld [vmem:[%s89] sm:$0x1]
    %91 = vrot.lane.b32.xlu0 %v90, 8
    %v92 = vpop.permute.xlu0 %91
    %vm93 = vcmask 130112
    %94 = vst.msk [vmem:[#allocation0] sm:$0x1] %vm93, %v92
    %s96 = sshllo.u32 0, 1
    %v98 = vld [vmem:[#allocation0] sm:%s96]
    %s99 = sshllo.u32 0, 1
    %100 = vst [vmem:[%s1] sm:%s99] %v98

// kernel: stgcn_block_forward.1
$region0: #{stgcn_block_forward.1}
  #allocation0 [shape = 'u32[]', space=smem, size = 0x4, offset = 0x4, fixed_abs, tag = 'smem constant byte address 0x4 - core index']
  #allocation1 [shape = 'u32[144,128]{1,0:T(1,128)}', space=vmem, size = 0x12000, scoped, tag = 'internal scratch']
  %s0 = inlined_call_operand.vmem [shape: f32[16,192], index: 0, kind: input, shape index: {}]
  %s1 = inlined_call_operand.vmem [shape: f32[192,256], index: 1, kind: input, shape index: {}]
  %s2 = inlined_call_operand.vmem [shape: f32[1,256], index: 2, kind: input, shape index: {}]
  %s3 = inlined_call_operand.vmem [shape: f32[128,128], index: 3, kind: input, shape index: {}]
  %s4 = inlined_call_operand.vmem [shape: f32[1,128], index: 4, kind: input, shape index: {}]
  %s5 = inlined_call_operand.vmem [shape: f32[384,128], index: 5, kind: input, shape index: {}]
  %s6 = inlined_call_operand.vmem [shape: f32[1,128], index: 6, kind: input, shape index: {}]
  %s7 = inlined_call_operand.vmem [shape: f32[1,128], index: 7, kind: input, shape index: {}]
  %s8 = inlined_call_operand.vmem [shape: f32[1,128], index: 8, kind: input, shape index: {}]
  %s9 = inlined_call_operand.vmem [shape: f32[16,128], index: 9, kind: output, shape index: {}]
  %s10 = sld [smem:[#allocation0]]
  $region46: #{stgcn_block_forward.1} parent=0
    _
  %s12 = ssub.s32 1, %s10
  %s13 = scalar_select 0, %s12, %s10
  // Predicated region
  $region2: #{stgcn_block_forward.1} parent=0 // pred_check
    _
  $region3: #{stgcn_block_forward.1} parent=0 // pred_check_branch
    %15 = sbr.rel (0) target = $region5
  $region4: #{stgcn_block_forward.1} parent=0 // pred_region
    _
  $region5: #{stgcn_block_forward.1} parent=0 // pred_fallthru
    _
  // Predicated region
  $region6: #{stgcn_block_forward.1} parent=0 // pred_check
    _
  $region7: #{stgcn_block_forward.1} parent=0 // pred_check_branch
    %17 = sbr.rel (0) target = $region9
  $region8: #{stgcn_block_forward.1} parent=0 // pred_region
    _
  $region9: #{stgcn_block_forward.1} parent=0 // pred_fallthru
    _
  // Predicated region
  $region10: #{stgcn_block_forward.1} parent=0 // pred_check
    _
  $region11: #{stgcn_block_forward.1} parent=0 // pred_check_branch
    %19 = sbr.rel (0) target = $region13
  $region12: #{stgcn_block_forward.1} parent=0 // pred_region
    _
  $region13: #{stgcn_block_forward.1} parent=0 // pred_fallthru
    _
  // Predicated region
  $region14: #{stgcn_block_forward.1} parent=0 // pred_check
    _
  $region15: #{stgcn_block_forward.1} parent=0 // pred_check_branch
    %21 = sbr.rel (0) target = $region17
  $region16: #{stgcn_block_forward.1} parent=0 // pred_region
    _
  $region17: #{stgcn_block_forward.1} parent=0 // pred_fallthru
    _
  // Predicated region
  $region18: #{stgcn_block_forward.1} parent=0 // pred_check
    _
  $region19: #{stgcn_block_forward.1} parent=0 // pred_check_branch
    %23 = sbr.rel (0) target = $region21
  $region20: #{stgcn_block_forward.1} parent=0 // pred_region
    _
  $region21: #{stgcn_block_forward.1} parent=0 // pred_fallthru
    _
  // Predicated region
  $region22: #{stgcn_block_forward.1} parent=0 // pred_check
    _
  $region23: #{stgcn_block_forward.1} parent=0 // pred_check_branch
    %25 = sbr.rel (0) target = $region25
  $region24: #{stgcn_block_forward.1} parent=0 // pred_region
    _
  $region25: #{stgcn_block_forward.1} parent=0 // pred_fallthru
    _
  // Predicated region
  $region26: #{stgcn_block_forward.1} parent=0 // pred_check
    _
  $region27: #{stgcn_block_forward.1} parent=0 // pred_check_branch
    %27 = sbr.rel (0) target = $region29
  $region28: #{stgcn_block_forward.1} parent=0 // pred_region
    _
  $region29: #{stgcn_block_forward.1} parent=0 // pred_fallthru
    _
  // Predicated region
  $region30: #{stgcn_block_forward.1} parent=0 // pred_check
    _
  $region31: #{stgcn_block_forward.1} parent=0 // pred_check_branch
    %29 = sbr.rel (0) target = $region33
  $region32: #{stgcn_block_forward.1} parent=0 // pred_region
    _
  $region33: #{stgcn_block_forward.1} parent=0 // pred_fallthru
    _
  // Predicated region
  $region34: #{stgcn_block_forward.1} parent=0 // pred_check
    _
  $region35: #{stgcn_block_forward.1} parent=0 // pred_check_branch
    %31 = sbr.rel (0) target = $region37
  $region36: #{stgcn_block_forward.1} parent=0 // pred_region
    _
  $region37: #{stgcn_block_forward.1} parent=0 // pred_fallthru
    _
  %v32 = vld [vmem:[%s0] sm:$0xff]
  %v33 = vld [vmem:[%s0 + $0x8] sm:$0xff]
  %v34 = vld [vmem:[%s0 + $0x10] sm:$0xff]
  %v35 = vld [vmem:[%s0 + $0x18] sm:$0xff]
  %v36 = vld [vmem:[%s1] sm:$0xff]
  %v37 = vld [vmem:[%s1 + $0x8] sm:$0xff]
  %v38 = vld [vmem:[%s1 + $0x10] sm:$0xff]
  %v39 = vld [vmem:[%s1 + $0x18] sm:$0xff]
  %v40 = vld [vmem:[%s1 + $0x20] sm:$0xff]
  %v41 = vld [vmem:[%s1 + $0x28] sm:$0xff]
  %v42 = vld [vmem:[%s1 + $0x30] sm:$0xff]
  %v43 = vld [vmem:[%s1 + $0x38] sm:$0xff]
  %v44 = vld [vmem:[%s1 + $0x40] sm:$0xff]
  %v45 = vld [vmem:[%s1 + $0x48] sm:$0xff]
  %v46 = vld [vmem:[%s1 + $0x50] sm:$0xff]
  %v47 = vld [vmem:[%s1 + $0x58] sm:$0xff]
  %v48 = vld [vmem:[%s1 + $0x60] sm:$0xff]
  %v49 = vld [vmem:[%s1 + $0x68] sm:$0xff]
  %v50 = vld [vmem:[%s1 + $0x70] sm:$0xff]
  %v51 = vld [vmem:[%s1 + $0x78] sm:$0xff]
  %v52 = vld [vmem:[%s1 + $0x80] sm:$0xff]
  %v53 = vld [vmem:[%s1 + $0x88] sm:$0xff]
  %v54 = vld [vmem:[%s1 + $0x90] sm:$0xff]
  %v55 = vld [vmem:[%s1 + $0x98] sm:$0xff]
  %v56 = vld [vmem:[%s1 + $0xa0] sm:$0xff]
  %v57 = vld [vmem:[%s1 + $0xa8] sm:$0xff]
  %v58 = vld [vmem:[%s1 + $0xb0] sm:$0xff]
  %v59 = vld [vmem:[%s1 + $0xb8] sm:$0xff]
  %v60 = vld [vmem:[%s1 + $0xc0] sm:$0xff]
  %v61 = vld [vmem:[%s1 + $0xc8] sm:$0xff]
  %v62 = vld [vmem:[%s1 + $0xd0] sm:$0xff]
  %v63 = vld [vmem:[%s1 + $0xd8] sm:$0xff]
  %v64 = vld [vmem:[%s1 + $0xe0] sm:$0xff]
  %v65 = vld [vmem:[%s1 + $0xe8] sm:$0xff]
  %v66 = vld [vmem:[%s1 + $0xf0] sm:$0xff]
  %v67 = vld [vmem:[%s1 + $0xf8] sm:$0xff]
  %v68 = vld [vmem:[%s1 + $0x100] sm:$0xff]
  %v69 = vld [vmem:[%s1 + $0x108] sm:$0xff]
  %v70 = vld [vmem:[%s1 + $0x110] sm:$0xff]
  %v71 = vld [vmem:[%s1 + $0x118] sm:$0xff]
  %v72 = vld [vmem:[%s1 + $0x120] sm:$0xff]
  %v73 = vld [vmem:[%s1 + $0x128] sm:$0xff]
  %v74 = vld [vmem:[%s1 + $0x130] sm:$0xff]
  %v75 = vld [vmem:[%s1 + $0x138] sm:$0xff]
  %v76 = vld [vmem:[%s1 + $0x140] sm:$0xff]
  %v77 = vld [vmem:[%s1 + $0x148] sm:$0xff]
  %v78 = vld [vmem:[%s1 + $0x150] sm:$0xff]
  %v79 = vld [vmem:[%s1 + $0x158] sm:$0xff]
  %v80 = vld [vmem:[%s1 + $0x160] sm:$0xff]
  %v81 = vld [vmem:[%s1 + $0x168] sm:$0xff]
  %v82 = vld [vmem:[%s1 + $0x170] sm:$0xff]
  %v83 = vld [vmem:[%s1 + $0x178] sm:$0xff]
  %v84 = vld [vmem:[%s2] sm:$0x3]
  %v86 = vlaneseq
  %v87 = vshrl.u32 %v86, 7
  %v88 = vsub.s32 0, %v87
  %v89 = vrot.slane %v84, %v88
  %v90 = vlaneseq
  %v91 = vshrl.u32 %v90, 7
  %v92 = vsub.s32 1, %v91
  %v93 = vrot.slane %v84, %v92
  %vm96 = vcmask 523264
  %v98 = vsel %vm96, %v33, 0
  %v101 = vsel %vm96, %v35, 0
  %103 = vmatprep.subr.mxu0 %v37
  %104 = vmatpush1.msra.mxu0 %v36
  %105 = vmatprep.subr.mxu0 %v39
  %106 = vmatpush1.msra.mxu0 %v38
  %107 = vmatprep.subr.mxu0 %v41
  %108 = vmatpush1.msra.mxu0 %v40
  %109 = vmatprep.subr.mxu0 %v43
  %110 = vmatpush1.msra.mxu0 %v42
  %111 = vmatprep.subr.mxu0 %v45
  %112 = vmatpush1.msra.mxu0 %v44
  %113 = vmatprep.subr.mxu0 %v47
  %114 = vmatpush1.msra.mxu0 %v46
  %115 = vmatprep.subr.mxu0 %v49
  %116 = vmatpush1.msra.mxu0 %v48
  %117 = vmatprep.subr.mxu0 %v51
  %118 = vmatpush1.msra.mxu0 %v50
  %119 = vmatprep.subr.mxu0 %v53
  %120 = vmatpush1.msra.mxu0 %v52
  %121 = vmatprep.subr.mxu0 %v55
  %122 = vmatpush1.msra.mxu0 %v54
  %123 = vmatprep.subr.mxu0 %v57
  %124 = vmatpush1.msra.mxu0 %v56
  %125 = vmatprep.subr.mxu0 %v59
  %126 = vmatpush1.msra.mxu0 %v58
  %127 = vmatprep.subr.mxu0 %v61
  %128 = vmatpush1.msra.mxu0 %v60
  %129 = vmatprep.subr.mxu0 %v63
  %130 = vmatpush1.msra.mxu0 %v62
  %131 = vmatprep.subr.mxu0 %v65
  %132 = vmatpush1.msra.mxu0 %v64
  %133 = vmatprep.subr.mxu0 %v67
  %134 = vmatpush1.msra.mxu0 %v66
  %135 = vmatprep.subr.mxu0 %v69
  %136 = vmatpush1.msra.mxu0 %v68
  %137 = vmatprep.subr.mxu0 %v71
  %138 = vmatpush1.msra.mxu0 %v70
  %139 = vmatprep.subr.mxu0 %v73
  %140 = vmatpush1.msra.mxu0 %v72
  %141 = vmatprep.subr.mxu0 %v75
  %142 = vmatpush1.msra.mxu0 %v74
  %143 = vmatprep.subr.mxu0 %v77
  %144 = vmatpush1.msra.mxu0 %v76
  %145 = vmatprep.subr.mxu0 %v79
  %146 = vmatpush1.msra.mxu0 %v78
  %147 = vmatprep.subr.mxu0 %v81
  %148 = vmatpush1.msra.mxu0 %v80
  %149 = vmatprep.subr.mxu0 %v83
  %150 = vmatpush1.msra.mxu0 %v82
  %151 = vmatprep.subr.mxu0 0.0
  %152 = vmatpush1.msra.mxu0 0.0
  %153 = vmatprep.subr.mxu0 0.0
  %154 = vmatpush1.msra.mxu0 0.0
  %155 = vmatprep.subr.mxu0 0.0
  %156 = vmatpush1.msra.mxu0 0.0
  %157 = vmatprep.subr.mxu0 0.0
  %158 = vmatpush1.msra.mxu0 0.0
  %159 = vmatprep.subr.mxu0 0.0
  %160 = vmatpush1.msra.mxu0 0.0
  %161 = vmatprep.subr.mxu0 0.0
  %162 = vmatpush1.msra.mxu0 0.0
  %163 = vmatprep.subr.mxu0 0.0
  %164 = vmatpush1.msra.mxu0 0.0
  %165 = vmatprep.subr.mxu0 0.0
  %166 = vmatpush1.msra.mxu0 0.0
  %167 = vmatprep.mubr.f32.mxu0 %v98
  %168 = vmatmul.mubr.f32.gmra.mrb[0].mxu0 %v32
  %v169 = vpop.f32.mrb[0].mxu0
  %v170 = vadd.f32 %v89, %v169
  %v171 = vpop.f32.mrb[0].mxu0
  %v172 = vadd.f32 %v93, %v171
  %173 = vmatprep.mubr.f32.mxu0 %v101
  %174 = vmatmul.mubr.f32.gmra.mrb[0].mxu0 %v34
  %v175 = vpop.f32.mrb[0].mxu0
  %v176 = vadd.f32 %v89, %v175
  %v177 = vpop.f32.mrb[0].mxu0
  %v178 = vadd.f32 %v93, %v177
  %179 = vdwg.mxu0
  %v180 = vxor.u32 %v172, 2147483648
  %v181 = vxor.u32 %v178, 2147483648
  %v182 = vmul.f32 %v180, 1.442695
  %v183 = vpow.pop %v182
  %v184 = vmul.f32 %v181, 1.442695
  %v185 = vpow.pop %v184
  %v186 = vadd.f32 %v183, 1.0
  %v187 = vadd.f32 %v185, 1.0
  %v188 = vrcp.pop %v186
  %v189 = vmul.f32 1.0, %v188
  %v190 = vrcp.pop %v187
  %v191 = vmul.f32 1.0, %v190
  %v192 = vmul.f32 %v170, %v189
  %v193 = vmul.f32 %v176, %v191
  %v194 = vld [vmem:[%s3] sm:$0xff]
  %v195 = vld [vmem:[%s3 + $0x8] sm:$0xff]
  %v196 = vld [vmem:[%s3 + $0x10] sm:$0xff]
  %v197 = vld [vmem:[%s3 + $0x18] sm:$0xff]
  %v198 = vld [vmem:[%s3 + $0x20] sm:$0xff]
  %v199 = vld [vmem:[%s3 + $0x28] sm:$0xff]
  %v200 = vld [vmem:[%s3 + $0x30] sm:$0xff]
  %v201 = vld [vmem:[%s3 + $0x38] sm:$0xff]
  %v202 = vld [vmem:[%s3 + $0x40] sm:$0xff]
  %v203 = vld [vmem:[%s3 + $0x48] sm:$0xff]
  %v204 = vld [vmem:[%s3 + $0x50] sm:$0xff]
  %v205 = vld [vmem:[%s3 + $0x58] sm:$0xff]
  %v206 = vld [vmem:[%s3 + $0x60] sm:$0xff]
  %v207 = vld [vmem:[%s3 + $0x68] sm:$0xff]
  %v208 = vld [vmem:[%s3 + $0x70] sm:$0xff]
  %v209 = vld [vmem:[%s3 + $0x78] sm:$0xff]
  %v210 = vld [vmem:[%s4] sm:$0x1]
  %v212 = vlaneseq
  %v213 = vshrl.u32 %v212, 7
  %v214 = vsub.s32 0, %v213
  %v215 = vrot.slane %v210, %v214
  %217 = vmatprep.subr.mxu0 0.0
  %218 = vmatpush1.msra.mxu0 %v194
  %219 = vmatprep.subr.mxu0 0.0
  %220 = vmatpush1.msra.mxu0 %v195
  %221 = vmatprep.subr.mxu0 0.0
  %222 = vmatpush1.msra.mxu0 %v196
  %223 = vmatprep.subr.mxu0 0.0
  %224 = vmatpush1.msra.mxu0 %v197
  %225 = vmatprep.subr.mxu0 0.0
  %226 = vmatpush1.msra.mxu0 %v198
  %227 = vmatprep.subr.mxu0 0.0
  %228 = vmatpush1.msra.mxu0 %v199
  %229 = vmatprep.subr.mxu0 0.0
  %230 = vmatpush1.msra.mxu0 %v200
  %231 = vmatprep.subr.mxu0 0.0
  %232 = vmatpush1.msra.mxu0 %v201
  %233 = vmatprep.subr.mxu0 0.0
  %234 = vmatpush1.msra.mxu0 %v202
  %235 = vmatprep.subr.mxu0 0.0
  %236 = vmatpush1.msra.mxu0 %v203
  %237 = vmatprep.subr.mxu0 0.0
  %238 = vmatpush1.msra.mxu0 %v204
  %239 = vmatprep.subr.mxu0 0.0
  %240 = vmatpush1.msra.mxu0 %v205
  %241 = vmatprep.subr.mxu0 0.0
  %242 = vmatpush1.msra.mxu0 %v206
  %243 = vmatprep.subr.mxu0 0.0
  %244 = vmatpush1.msra.mxu0 %v207
  %245 = vmatprep.subr.mxu0 0.0
  %246 = vmatpush1.msra.mxu0 %v208
  %247 = vmatprep.subr.mxu0 0.0
  %248 = vmatpush1.msra.mxu0 %v209
  %249 = vmatprep.subr.mxu0 0.0
  %250 = vmatpush1.msra.mxu0 0.0
  %251 = vmatprep.subr.mxu0 0.0
  %252 = vmatpush1.msra.mxu0 0.0
  %253 = vmatprep.subr.mxu0 0.0
  %254 = vmatpush1.msra.mxu0 0.0
  %255 = vmatprep.subr.mxu0 0.0
  %256 = vmatpush1.msra.mxu0 0.0
  %257 = vmatprep.subr.mxu0 0.0
  %258 = vmatpush1.msra.mxu0 0.0
  %259 = vmatprep.subr.mxu0 0.0
  %260 = vmatpush1.msra.mxu0 0.0
  %261 = vmatprep.subr.mxu0 0.0
  %262 = vmatpush1.msra.mxu0 0.0
  %263 = vmatprep.subr.mxu0 0.0
  %264 = vmatpush1.msra.mxu0 0.0
  %265 = vmatprep.subr.mxu0 0.0
  %266 = vmatpush1.msra.mxu0 0.0
  %267 = vmatprep.subr.mxu0 0.0
  %268 = vmatpush1.msra.mxu0 0.0
  %269 = vmatprep.subr.mxu0 0.0
  %270 = vmatpush1.msra.mxu0 0.0
  %271 = vmatprep.subr.mxu0 0.0
  %272 = vmatpush1.msra.mxu0 0.0
  %273 = vmatprep.subr.mxu0 0.0
  %274 = vmatpush1.msra.mxu0 0.0
  %275 = vmatprep.subr.mxu0 0.0
  %276 = vmatpush1.msra.mxu0 0.0
  %277 = vmatprep.subr.mxu0 0.0
  %278 = vmatpush1.msra.mxu0 0.0
  %279 = vmatprep.subr.mxu0 0.0
  %280 = vmatpush1.msra.mxu0 0.0
  %281 = vmatprep.mubr.f32.mxu0 0.0
  %282 = vmatmul.mubr.f32.gmra.mrb[0].mxu0 %v192
  %v283 = vpop.f32.mrb[0].mxu0
  %v284 = vadd.f32 %v215, %v283
  %v285 = vpop.f32.mrb[0].mxu0
  %286 = vmatprep.mubr.f32.mxu0 0.0
  %287 = vmatmul.mubr.f32.gmra.mrb[0].mxu0 %v193
  %v288 = vpop.f32.mrb[0].mxu0
  %v289 = vadd.f32 %v215, %v288
  %v290 = vpop.f32.mrb[0].mxu0
  %291 = vdwg.mxu0
  %v292 = vadd.f32 %v284, %v192
  %v293 = vadd.f32 %v289, %v193
  %v294 = vmax.f32 %v292, 0.0
  %v295 = vmax.f32 %v293, 0.0
  %vm299 = vcmask 1046528
  %v300 = vrot.slane %v294, 1
  %v301 = vrot.slane %v295, 1
  %v302 = vsel %vm299, %v300, %v301
  %v303 = vrot.slane 0.0, 1
  %v304 = vsel %vm299, %v301, %v303
  %vm307 = vcmask 1045504
  %v308 = vrot.slane %v294, 2
  %v309 = vrot.slane %v295, 2
  %v310 = vsel %vm307, %v308, %v309
  %v311 = vrot.slane 0.0, 2
  %v312 = vsel %vm307, %v309, %v311
  %v315 = vld [vmem:[%s5] sm:$0xff]
  %v316 = vld [vmem:[%s5 + $0x8] sm:$0xff]
  %v317 = vld [vmem:[%s5 + $0x10] sm:$0xff]
  %v318 = vld [vmem:[%s5 + $0x18] sm:$0xff]
  %v319 = vld [vmem:[%s5 + $0x20] sm:$0xff]
  %v320 = vld [vmem:[%s5 + $0x28] sm:$0xff]
  %v321 = vld [vmem:[%s5 + $0x30] sm:$0xff]
  %v322 = vld [vmem:[%s5 + $0x38] sm:$0xff]
  %v323 = vld [vmem:[%s5 + $0x40] sm:$0xff]
  %v324 = vld [vmem:[%s5 + $0x48] sm:$0xff]
  %v325 = vld [vmem:[%s5 + $0x50] sm:$0xff]
  %v326 = vld [vmem:[%s5 + $0x58] sm:$0xff]
  %v327 = vld [vmem:[%s5 + $0x60] sm:$0xff]
  %v328 = vld [vmem:[%s5 + $0x68] sm:$0xff]
  %v329 = vld [vmem:[%s5 + $0x70] sm:$0xff]
  %v330 = vld [vmem:[%s5 + $0x78] sm:$0xff]
  %v331 = vld [vmem:[%s5 + $0x80] sm:$0xff]
  %v332 = vld [vmem:[%s5 + $0x88] sm:$0xff]
  %v333 = vld [vmem:[%s5 + $0x90] sm:$0xff]
  %v334 = vld [vmem:[%s5 + $0x98] sm:$0xff]
  %v335 = vld [vmem:[%s5 + $0xa0] sm:$0xff]
  %v336 = vld [vmem:[%s5 + $0xa8] sm:$0xff]
  %v337 = vld [vmem:[%s5 + $0xb0] sm:$0xff]
  %v338 = vld [vmem:[%s5 + $0xb8] sm:$0xff]
  %v339 = vld [vmem:[%s5 + $0xc0] sm:$0xff]
  %v340 = vld [vmem:[%s5 + $0xc8] sm:$0xff]
  %v341 = vld [vmem:[%s5 + $0xd0] sm:$0xff]
  %v342 = vld [vmem:[%s5 + $0xd8] sm:$0xff]
  %v343 = vld [vmem:[%s5 + $0xe0] sm:$0xff]
  %v344 = vld [vmem:[%s5 + $0xe8] sm:$0xff]
  %v345 = vld [vmem:[%s5 + $0xf0] sm:$0xff]
  %v346 = vld [vmem:[%s5 + $0xf8] sm:$0xff]
  %v347 = vld [vmem:[%s5 + $0x100] sm:$0xff]
  %v348 = vld [vmem:[%s5 + $0x108] sm:$0xff]
  %v349 = vld [vmem:[%s5 + $0x110] sm:$0xff]
  %v350 = vld [vmem:[%s5 + $0x118] sm:$0xff]
  %v351 = vld [vmem:[%s5 + $0x120] sm:$0xff]
  %v352 = vld [vmem:[%s5 + $0x128] sm:$0xff]
  %v353 = vld [vmem:[%s5 + $0x130] sm:$0xff]
  %v354 = vld [vmem:[%s5 + $0x138] sm:$0xff]
  %v355 = vld [vmem:[%s5 + $0x140] sm:$0xff]
  %v356 = vld [vmem:[%s5 + $0x148] sm:$0xff]
  %v357 = vld [vmem:[%s5 + $0x150] sm:$0xff]
  %v358 = vld [vmem:[%s5 + $0x158] sm:$0xff]
  %v359 = vld [vmem:[%s5 + $0x160] sm:$0xff]
  %v360 = vld [vmem:[%s5 + $0x168] sm:$0xff]
  %v361 = vld [vmem:[%s5 + $0x170] sm:$0xff]
  %v362 = vld [vmem:[%s5 + $0x178] sm:$0xff]
  %v363 = vld [vmem:[%s6] sm:$0x1]
  %v365 = vlaneseq
  %v366 = vshrl.u32 %v365, 7
  %v367 = vsub.s32 0, %v366
  %v368 = vrot.slane %v363, %v367
  %370 = vmatprep.subr.mxu0 0.0
  %371 = vmatpush1.msra.mxu0 %v315
  %372 = vmatprep.subr.mxu0 0.0
  %373 = vmatpush1.msra.mxu0 %v316
  %374 = vmatprep.subr.mxu0 0.0
  %375 = vmatpush1.msra.mxu0 %v317
  %376 = vmatprep.subr.mxu0 0.0
  %377 = vmatpush1.msra.mxu0 %v318
  %378 = vmatprep.subr.mxu0 0.0
  %379 = vmatpush1.msra.mxu0 %v319
  %380 = vmatprep.subr.mxu0 0.0
  %381 = vmatpush1.msra.mxu0 %v320
  %382 = vmatprep.subr.mxu0 0.0
  %383 = vmatpush1.msra.mxu0 %v321
  %384 = vmatprep.subr.mxu0 0.0
  %385 = vmatpush1.msra.mxu0 %v322
  %386 = vmatprep.subr.mxu0 0.0
  %387 = vmatpush1.msra.mxu0 %v323
  %388 = vmatprep.subr.mxu0 0.0
  %389 = vmatpush1.msra.mxu0 %v324
  %390 = vmatprep.subr.mxu0 0.0
  %391 = vmatpush1.msra.mxu0 %v325
  %392 = vmatprep.subr.mxu0 0.0
  %393 = vmatpush1.msra.mxu0 %v326
  %394 = vmatprep.subr.mxu0 0.0
  %395 = vmatpush1.msra.mxu0 %v327
  %396 = vmatprep.subr.mxu0 0.0
  %397 = vmatpush1.msra.mxu0 %v328
  %398 = vmatprep.subr.mxu0 0.0
  %399 = vmatpush1.msra.mxu0 %v329
  %400 = vmatprep.subr.mxu0 0.0
  %401 = vmatpush1.msra.mxu0 %v330
  %402 = vmatprep.subr.mxu0 0.0
  %403 = vmatpush1.msra.mxu0 %v331
  %404 = vmatprep.subr.mxu0 0.0
  %405 = vmatpush1.msra.mxu0 %v332
  %406 = vmatprep.subr.mxu0 0.0
  %407 = vmatpush1.msra.mxu0 %v333
  %408 = vmatprep.subr.mxu0 0.0
  %409 = vmatpush1.msra.mxu0 %v334
  %410 = vmatprep.subr.mxu0 0.0
  %411 = vmatpush1.msra.mxu0 %v335
  %412 = vmatprep.subr.mxu0 0.0
  %413 = vmatpush1.msra.mxu0 %v336
  %414 = vmatprep.subr.mxu0 0.0
  %415 = vmatpush1.msra.mxu0 %v337
  %416 = vmatprep.subr.mxu0 0.0
  %417 = vmatpush1.msra.mxu0 %v338
  %418 = vmatprep.subr.mxu0 0.0
  %419 = vmatpush1.msra.mxu0 %v339
  %420 = vmatprep.subr.mxu0 0.0
  %421 = vmatpush1.msra.mxu0 %v340
  %422 = vmatprep.subr.mxu0 0.0
  %423 = vmatpush1.msra.mxu0 %v341
  %424 = vmatprep.subr.mxu0 0.0
  %425 = vmatpush1.msra.mxu0 %v342
  %426 = vmatprep.subr.mxu0 0.0
  %427 = vmatpush1.msra.mxu0 %v343
  %428 = vmatprep.subr.mxu0 0.0
  %429 = vmatpush1.msra.mxu0 %v344
  %430 = vmatprep.subr.mxu0 0.0
  %431 = vmatpush1.msra.mxu0 %v345
  %432 = vmatprep.subr.mxu0 0.0
  %433 = vmatpush1.msra.mxu0 %v346
  %434 = vmatprep.mubr.f32.mxu0 %v302
  %435 = vmatmul.mubr.f32.gmra.mrb[0].mxu0 %v294
  %v436 = vpop.f32.mrb[0].mxu0
  %v437 = vadd.f32 %v368, %v436
  %v438 = vpop.f32.mrb[0].mxu0
  %439 = vmatprep.mubr.f32.mxu0 %v304
  %440 = vmatmul.mubr.f32.gmra.mrb[0].mxu0 %v295
  %v441 = vpop.f32.mrb[0].mxu0
  %v442 = vadd.f32 %v368, %v441
  %v443 = vpop.f32.mrb[0].mxu0
  %444 = vdwg.mxu0
  %445 = vmatprep.subr.mxu0 0.0
  %446 = vmatpush1.msra.mxu0 %v347
  %447 = vmatprep.subr.mxu0 0.0
  %448 = vmatpush1.msra.mxu0 %v348
  %449 = vmatprep.subr.mxu0 0.0
  %450 = vmatpush1.msra.mxu0 %v349
  %451 = vmatprep.subr.mxu0 0.0
  %452 = vmatpush1.msra.mxu0 %v350
  %453 = vmatprep.subr.mxu0 0.0
  %454 = vmatpush1.msra.mxu0 %v351
  %455 = vmatprep.subr.mxu0 0.0
  %456 = vmatpush1.msra.mxu0 %v352
  %457 = vmatprep.subr.mxu0 0.0
  %458 = vmatpush1.msra.mxu0 %v353
  %459 = vmatprep.subr.mxu0 0.0
  %460 = vmatpush1.msra.mxu0 %v354
  %461 = vmatprep.subr.mxu0 0.0
  %462 = vmatpush1.msra.mxu0 %v355
  %463 = vmatprep.subr.mxu0 0.0
  %464 = vmatpush1.msra.mxu0 %v356
  %465 = vmatprep.subr.mxu0 0.0
  %466 = vmatpush1.msra.mxu0 %v357
  %467 = vmatprep.subr.mxu0 0.0
  %468 = vmatpush1.msra.mxu0 %v358
  %469 = vmatprep.subr.mxu0 0.0
  %470 = vmatpush1.msra.mxu0 %v359
  %471 = vmatprep.subr.mxu0 0.0
  %472 = vmatpush1.msra.mxu0 %v360
  %473 = vmatprep.subr.mxu0 0.0
  %474 = vmatpush1.msra.mxu0 %v361
  %475 = vmatprep.subr.mxu0 0.0
  %476 = vmatpush1.msra.mxu0 %v362
  %477 = vmatprep.subr.mxu0 0.0
  %478 = vmatpush1.msra.mxu0 0.0
  %479 = vmatprep.subr.mxu0 0.0
  %480 = vmatpush1.msra.mxu0 0.0
  %481 = vmatprep.subr.mxu0 0.0
  %482 = vmatpush1.msra.mxu0 0.0
  %483 = vmatprep.subr.mxu0 0.0
  %484 = vmatpush1.msra.mxu0 0.0
  %485 = vmatprep.subr.mxu0 0.0
  %486 = vmatpush1.msra.mxu0 0.0
  %487 = vmatprep.subr.mxu0 0.0
  %488 = vmatpush1.msra.mxu0 0.0
  %489 = vmatprep.subr.mxu0 0.0
  %490 = vmatpush1.msra.mxu0 0.0
  %491 = vmatprep.subr.mxu0 0.0
  %492 = vmatpush1.msra.mxu0 0.0
  %493 = vmatprep.subr.mxu0 0.0
  %494 = vmatpush1.msra.mxu0 0.0
  %495 = vmatprep.subr.mxu0 0.0
  %496 = vmatpush1.msra.mxu0 0.0
  %497 = vmatprep.subr.mxu0 0.0
  %498 = vmatpush1.msra.mxu0 0.0
  %499 = vmatprep.subr.mxu0 0.0
  %500 = vmatpush1.msra.mxu0 0.0
  %501 = vmatprep.subr.mxu0 0.0
  %502 = vmatpush1.msra.mxu0 0.0
  %503 = vmatprep.subr.mxu0 0.0
  %504 = vmatpush1.msra.mxu0 0.0
  %505 = vmatprep.subr.mxu0 0.0
  %506 = vmatpush1.msra.mxu0 0.0
  %507 = vmatprep.subr.mxu0 0.0
  %508 = vmatpush1.msra.mxu0 0.0
  %509 = vmatprep.mubr.f32.mxu0 0.0
  %510 = vmatmul.mubr.f32.gmra.mrb[0].mxu0 %v310
  %v511 = vpop.f32.mrb[0].mxu0
  %v512 = vadd.f32 %v437, %v511
  %v513 = vpop.f32.mrb[0].mxu0
  %514 = vmatprep.mubr.f32.mxu0 0.0
  %515 = vmatmul.mubr.f32.gmra.mrb[0].mxu0 %v312
  %v516 = vpop.f32.mrb[0].mxu0
  %v517 = vadd.f32 %v442, %v516
  %v518 = vpop.f32.mrb[0].mxu0
  %519 = vdwg.mxu0
  %v520 = vmax.f32 %v512, 0.0
  %v521 = vmax.f32 %v517, 0.0
  %522 = vadd.xlane.f32.xlu0 %v520
  %v523 = vpop.xlane.xlu0 %522
  %524 = vadd.xlane.f32.xlu0 %v521
  %v525 = vpop.xlane.xlu0 %524
  %v526 = vrcp.pop 128.0
  %v527 = vmul.f32 %v523, %v526
  %v528 = vmul.f32 %v525, %v526
  %v529 = vmul.f32 %v520, %v520
  %v530 = vmul.f32 %v521, %v521
  %531 = vadd.xlane.f32.xlu0 %v529
  %v532 = vpop.xlane.xlu0 %531
  %533 = vadd.xlane.f32.xlu0 %v530
  %v534 = vpop.xlane.xlu0 %533
  %v535 = vmul.f32 %v532, %v526
  %v536 = vmul.f32 %v534, %v526
  %v537 = vsub.f32 %v520, %v527
  %v538 = vsub.f32 %v521, %v528
  %v539 = vmul.f32 %v527, %v527
  %v540 = vmul.f32 %v528, %v528
  %v541 = vsub.f32 %v535, %v539
  %v542 = vsub.f32 %v536, %v540
  %v543 = vadd.f32 %v541, 1e-05
  %v544 = vadd.f32 %v542, 1e-05
  %v545 = vrsqrt.pop %v543
  %v546 = vrsqrt.pop %v544
  %v547 = vmul.f32 %v537, %v545
  %v548 = vmul.f32 %v538, %v546
  %v549 = vld [vmem:[%s7] sm:$0x1]
  %v551 = vlaneseq
  %v552 = vshrl.u32 %v551, 7
  %v553 = vsub.s32 0, %v552
  %v554 = vrot.slane %v549, %v553
  %v556 = vmul.f32 %v547, %v554
  %v557 = vmul.f32 %v548, %v554
  %v558 = vld [vmem:[%s8] sm:$0x1]
  %v560 = vlaneseq
  %v561 = vshrl.u32 %v560, 7
  %v562 = vsub.s32 0, %v561
  %v563 = vrot.slane %v558, %v562
  %v565 = vadd.f32 %v556, %v563
  %v566 = vadd.f32 %v557, %v563
  %567 = vst [vmem:[%s9] sm:$0xff] %v565
  %568 = vst [vmem:[%s9 + $0x8] sm:$0xff] %v566
  // Predicated region
  $region38: #{stgcn_block_forward.1} parent=0 // pred_check
    _
  $region39: #{stgcn_block_forward.1} parent=0 // pred_check_branch
    %570 = sbr.rel (0) target = $region41
  $region40: #{stgcn_block_forward.1} parent=0 // pred_region
    _
  $region41: #{stgcn_block_forward.1} parent=0 // pred_fallthru
    _
  // Predicated region
  $region42: #{stgcn_block_forward.1} parent=0 // pred_check
    _
  $region43: #{stgcn_block_forward.1} parent=0 // pred_check_branch
    %572 = sbr.rel (0) target = $region45
  $region44: #{stgcn_block_forward.1} parent=0 // pred_region
    _
  $region45: #{stgcn_block_forward.1} parent=0 // pred_fallthru
    _

</llo_original>
